<compile_context>
chip_gen: v5e
topology: v5e:2x2
jax: 0.10.0
libtpu: 0.0.40
codegen_flags: <defaults>
</compile_context>

<pallas_src>
import jax
import jax.numpy as jnp
import numpy as np
from jax.experimental import pallas as pl
from jax.experimental.pallas import tpu as pltpu


# ---------------------------------------------------------------------------
# VMEM budgeting (generation aware)
# ---------------------------------------------------------------------------
def _round_up(x, m):
    return ((x + m - 1) // m) * m


def _vmem_budget_bytes():
    """~75% of physical VMEM: ~96 MiB on v5e/v6e (128 MiB), ~48 MiB on v7x (64 MiB)."""
    try:
        cap = int(pltpu.get_tpu_info().vmem_capacity_bytes)
    except Exception:
        cap = 64 * 1024 * 1024  # conservative fallback (safe on every generation)
    return int(max(16 * 1024 * 1024, min(cap * 3 // 4, 112 * 1024 * 1024)))


def _derive_rows(n_rows, hin, out_widths, budget, single_buffer):
    """Largest row tile for the projection kernels that fits the VMEM budget."""
    wbuf = 1 if single_buffer else 2
    out_pad = sum(_round_up(w, 128) for w in out_widths)
    resident = 4 * wbuf * (_round_up(hin, 8) * out_pad + 8 * out_pad)
    per_row = 4 * 2 * (_round_up(hin, 128) + out_pad)       # in + out tiles, 2x buffered
    avail = budget - resident - (4 << 20)
    tm = max(8, avail // per_row) if per_row > 0 else n_rows
    tm = int(min(tm, 2048))
    if tm >= n_rows:
        return n_rows
    return max(8, (tm // 8) * 8)


def _derive_block_batch(B, L, nh, d, H, budget, single_buffer):
    """Largest batch tile for the attention kernel that fits the VMEM budget."""
    lane, sub = 128, 8
    ru = _round_up
    per_b = 4 * 2 * (                         # f32, double buffered
        nh * ru(d, sub) * lane                # q0  (nh, d, 1)  (lane padded)
        + nh * ru(d, sub) * ru(L, lane)       # q1t (nh, d, L)
        + ru(L, sub) * ru(H, lane)            # q2  (L, H)
        + ru(1, sub) * ru(L, lane)            # mask (1, L)
        + ru(1, sub) * ru(H, lane)            # a out (1, H)
        + ru(nh, sub) * ru(L, lane)           # alpha out (nh, L)
    )
    wbuf = 1 if single_buffer else 2
    resident = 4 * wbuf * ru(nh, sub) * ru(H, lane)          # head-expansion matrix
    avail = budget - resident - (4 << 20)
    bt = max(1, int(avail // max(per_b, 1)))
    bt = min(bt, B)
    if B >= 2:
        bt = min(bt, -(-B // 2))              # >= 2 grid steps so v7x can use both cores
    return max(1, bt)


def _pick_rows(n, block_rows):
    tm = min(n, max(1, block_rows))
    if tm < n:
        tm = max(8, (tm // 8) * 8)
    return tm


def _resident_spec(shape, single_buffer):
    # Constant index_map => resident across grid steps; single-buffer it when supported
    # so the (H, 2H) weight is not allocated twice (matters at large H, esp. on v7x).
    if single_buffer:
        return pl.BlockSpec(shape, lambda i: (0,) * len(shape),
                            pipeline_mode=pl.Buffered(1))
    return pl.BlockSpec(shape, lambda i: (0,) * len(shape))


# ---------------------------------------------------------------------------
# Projection kernels
# ---------------------------------------------------------------------------
def _linear_kernel(x_ref, wt_ref, b_ref, o_ref):
    # y = x @ W^T + b  (wt_ref already holds W^T; resident across row tiles)
    o_ref[...] = (
        jnp.dot(x_ref[...], wt_ref[...], preferred_element_type=jnp.float32)
        + b_ref[...]
    ).astype(o_ref.dtype)


def _dual_linear_kernel(x_ref, wt_ref, b_ref, o1_ref, o2_ref):
    # One wide MXU matmul against the concatenated [W1^T | W2^T]; split on lanes.
    y = (
        jnp.dot(x_ref[...], wt_ref[...], preferred_element_type=jnp.float32)
        + b_ref[...]
    )
    h = o1_ref.shape[-1]
    o1_ref[...] = y[:, :h].astype(o1_ref.dtype)
    o2_ref[...] = y[:, h:].astype(o2_ref.dtype)


def _tiled_linear(x, wt, b, *, block_rows, vmem_limit, single_buffer):
    n, hin = x.shape
    h_out = wt.shape[1]
    tm = _pick_rows(n, block_rows)
    return pl.pallas_call(
        _linear_kernel,
        out_shape=jax.ShapeDtypeStruct((n, h_out), jnp.float32),
        grid=(pl.cdiv(n, tm),),
        in_specs=[
            pl.BlockSpec((tm, hin), lambda i: (i, 0)),
            _resident_spec((hin, h_out), single_buffer),
            _resident_spec((1, h_out), single_buffer),
        ],
        out_specs=pl.BlockSpec((tm, h_out), lambda i: (i, 0)),
        compiler_params=pltpu.CompilerParams(
            dimension_semantics=("parallel",),
            vmem_limit_bytes=vmem_limit,
        ),
    )(x, wt, b)


def _tiled_dual_linear(x, wt, b, *, block_rows, vmem_limit, single_buffer):
    n, hin = x.shape
    h2 = wt.shape[1]
    h = h2 // 2
    tm = _pick_rows(n, block_rows)
    return pl.pallas_call(
        _dual_linear_kernel,
        out_shape=(
            jax.ShapeDtypeStruct((n, h), jnp.float32),
            jax.ShapeDtypeStruct((n, h), jnp.float32),
        ),
        grid=(pl.cdiv(n, tm),),
        in_specs=[
            pl.BlockSpec((tm, hin), lambda i: (i, 0)),
            _resident_spec((hin, h2), single_buffer),
            _resident_spec((1, h2), single_buffer),
        ],
        out_specs=(
            pl.BlockSpec((tm, h), lambda i: (i, 0)),
            pl.BlockSpec((tm, h), lambda i: (i, 0)),
        ),
        compiler_params=pltpu.CompilerParams(
            dimension_semantics=("parallel",),
            vmem_limit_bytes=vmem_limit,
        ),
    )(x, wt, b)


# ---------------------------------------------------------------------------
# Attention kernels
# ---------------------------------------------------------------------------
def _attn_common(q0, q1t, mask):
    # q0: (Bt, nh, d, 1), q1t: (Bt, nh, d, L), mask: (Bt, 1, L)
    # scores[b,h,l] = <q0[b,h,:], q1[b,h,l,:]> : VPU broadcast-multiply + sublane reduce
    scores = jnp.sum(q0 * q1t, axis=2)                         # (Bt, nh, L)
    # softmax_L(2*sigmoid(scores)); sigmoid is bounded in (0,1) => no max-subtraction.
    e = jnp.exp(2.0 * jax.nn.sigmoid(scores))
    # pl.reciprocal(..., approx=True) would move this to the EUP at ~1e-3 rel error;
    # kept exact to preserve 1e-4 parity with the reference.
    alpha = e * pl.reciprocal(jnp.sum(e, axis=2, keepdims=True))
    # TODO(synk): F.dropout(p=0.1) on alpha omitted -- eval-mode forward only.
    w = alpha * mask                                           # (Bt, nh, L)
    return alpha, w


def _attn_kernel_opt(q0_ref, q1t_ref, q2_ref, mask_ref, sel_ref, a_ref, alpha_ref):
    # a[b, :] = sum_l mask[b,l] * expand_heads(alpha[b,:,l]) * q2[b,l,:]
    # expand via one tiny (Bt*L, nh) @ (nh, H) matmul against the one-hot head matrix;
    # stays lane-dense on H, no nh-fold MXU overcompute, no (Bt, nh, H) intermediate.
    Bt, nh, d, L = q1t_ref.shape
    H = q2_ref.shape[-1]
    alpha, w = _attn_common(q0_ref[...], q1t_ref[...], mask_ref[...])
    alpha_ref[...] = alpha.astype(alpha_ref.dtype)             # (Bt, nh, L), lane-dense
    w_t = jnp.swapaxes(w, 1, 2).reshape(Bt * L, nh)            # small XLU transpose
    wex = jnp.dot(w_t, sel_ref[...],
                  preferred_element_type=jnp.float32).reshape(Bt, L, H)
    a_ref[...] = jnp.sum(wex * q2_ref[...], axis=1,
                         keepdims=True).astype(a_ref.dtype)    # (Bt, 1, H)


def _attn_kernel_safe(q0_ref, q1t_ref, q2_ref, mask_ref, sel_ref, a_ref, alpha_ref):
    # Fallback 'a' path (no in-kernel transpose): batched MXU contraction over L plus a
    # block-diagonal head mask (nh-fold overcompute, but guaranteed to lower).
    alpha, w = _attn_common(q0_ref[...], q1t_ref[...], mask_ref[...])
    alpha_ref[...] = alpha.astype(alpha_ref.dtype)
    g = jnp.einsum("bhl,blc->bhc", w, q2_ref[...],
                   preferred_element_type=jnp.float32)         # (Bt, nh, H)
    a_ref[...] = jnp.sum(g * sel_ref[...][None], axis=1,
                         keepdims=True).astype(a_ref.dtype)    # (Bt, 1, H)


def _attention(q0k, q1t, q2n, mask_r, sel, *, block_batch, vmem_limit,
               optimized, single_buffer):
    B, nh, d, L = q1t.shape
    H = q2n.shape[-1]
    Bt = max(1, min(block_batch, B))
    kernel = _attn_kernel_opt if optimized else _attn_kernel_safe
    return pl.pallas_call(
        kernel,
        out_shape=(
            jax.ShapeDtypeStruct((B, 1, H), jnp.float32),      # lane-dense 'a'
            jax.ShapeDtypeStruct((B, nh, L), jnp.float32),     # lane-dense alpha (L minor)
        ),
        grid=(pl.cdiv(B, Bt),),
        in_specs=[
            pl.BlockSpec((Bt, nh, d, 1), lambda i: (i, 0, 0, 0)),
            pl.BlockSpec((Bt, nh, d, L), lambda i: (i, 0, 0, 0)),
            pl.BlockSpec((Bt, L, H), lambda i: (i, 0, 0)),
            pl.BlockSpec((Bt, 1, L), lambda i: (i, 0, 0)),
            _resident_spec((nh, H), single_buffer),
        ],
        out_specs=(
            pl.BlockSpec((Bt, 1, H), lambda i: (i, 0, 0)),
            pl.BlockSpec((Bt, nh, L), lambda i: (i, 0, 0)),
        ),
        compiler_params=pltpu.CompilerParams(
            dimension_semantics=("parallel",),
            vmem_limit_bytes=vmem_limit,
        ),
    )(q0k, q1t, q2n, mask_r, sel)


# ---------------------------------------------------------------------------
# Forward wrapper
# ---------------------------------------------------------------------------
def _forward_impl(params, ht1, hidden, mask, heads, budget, optimized, single_buffer,
                  block_rows=None, block_batch=None):
    B, Lt, H = ht1.shape
    L = hidden.shape[1]
    nh = heads
    d = H // nh
    assert Lt == 1, "non-conv path of LastAttenion requires ht1.shape[1] == 1"
    assert H % nh == 0

    f32 = jnp.float32
    # Pre-transposed / pre-fused parameters (stored once in a real deployment).
    # TODO(synk): at large H, keep w12t in bf16 or K-tile the contraction so the resident
    # weight fits v7x's 64 MiB VMEM; kept f32 here for exact parity with the torch module.
    w0t = params["w0"].T.astype(f32)                                              # (H, H)
    b0 = params["b0"].reshape(1, H).astype(f32)
    w12t = jnp.concatenate([params["w1"].T, params["w2"].T], axis=1).astype(f32)  # (H, 2H)
    b12 = jnp.concatenate([params["b1"], params["b2"]]).reshape(1, 2 * H).astype(f32)

    # q0 projection (tiny: B rows).
    rows0 = block_rows or _derive_rows(B, H, (H,), budget, single_buffer)
    q0l = _tiled_linear(ht1.reshape(B, H).astype(f32), w0t, b0,
                        block_rows=rows0, vmem_limit=budget,
                        single_buffer=single_buffer)                               # (B, H)

    # Fused q1/q2 projection: `hidden` read from HBM once; single wide matmul.
    # TODO(synk): further fusion of this projection into the attention kernel (consuming
    # q1/q2 from VMEM) would remove the q1l/q2l HBM round trip entirely.
    rows12 = block_rows or _derive_rows(B * L, H, (H, H), budget, single_buffer)
    q1l, q2l = _tiled_dual_linear(hidden.reshape(B * L, H).astype(f32), w12t, b12,
                                  block_rows=rows12, vmem_limit=budget,
                                  single_buffer=single_buffer)                     # (B*L, H) x2

    # torch's `.view(-1, L, d)` scramble on q1: metadata-only reshape in HBM, followed by
    # ONE XLA transpose so the attention kernel sees q1 lane-dense on L (no d-lane padding,
    # no M=1 matmuls).  q2's two torch views cancel -> natural (B, L, H) layout.
    q1t = jnp.transpose(q1l.reshape(B, nh, L, d), (0, 1, 3, 2))                    # (B, nh, d, L)
    q0k = q0l.reshape(B, nh, d, 1)
    q2n = q2l.reshape(B, L, H)
    mask_r = mask.astype(f32).reshape(B, 1, L)
    # Head-expansion matrix (one-hot blocks), built once and kept resident in the kernel.
    sel = (jnp.arange(H, dtype=jnp.int32)[None, :] // d
           == jnp.arange(nh, dtype=jnp.int32)[:, None]).astype(f32)               # (nh, H)

    Bt = block_batch or _derive_block_batch(B, L, nh, d, H, budget, single_buffer)
    a3, alpha_hl = _attention(q0k, q1t, q2n, mask_r, sel, block_batch=Bt,
                              vmem_limit=budget, optimized=optimized,
                              single_buffer=single_buffer)

    # (B, L, nh) layout expected by callers: layout plumbing on the small alpha tensor.
    return a3.reshape(B, H), jnp.transpose(alpha_hl, (0, 2, 1))


def last_attention_forward(params, ht1, hidden, mask, heads, *,
                           block_rows=None, block_batch=None):
    budget = _vmem_budget_bytes()
    err = None
    # Try the fully optimized configuration first; fall back if the installed Mosaic
    # rejects pl.Buffered(1) or the in-kernel minor-dims transpose.
    for optimized, single_buffer in ((True, True), (True, False), (False, False)):
        try:
            a, alpha = _forward_impl(params, ht1, hidden, mask, heads, budget,
                                     optimized, single_buffer,
                                     block_rows=block_rows, block_batch=block_batch)
            jax.block_until_ready((a, alpha))
            return a, alpha
        except Exception as e:  # pragma: no cover - lowering fallback
            err = e
    raise err


# ---------------------------------------------------------------------------
# Pure-JAX reference mirroring the PyTorch forward (eval mode)
# ---------------------------------------------------------------------------
def ref_forward(params, ht1, hidden, mask, heads):
    B, Lt, H = ht1.shape
    L = hidden.shape[1]
    d = H // heads
    q0 = (ht1 @ params["w0"].T + params["b0"]).reshape(-1, Lt, d)
    q1 = (hidden @ params["w1"].T + params["b1"]).reshape(-1, L, d)
    q2 = (hidden @ params["w2"].T + params["b2"]).reshape(-1, L, d)
    alpha = jax.nn.sigmoid(jnp.einsum("btd,bsd->bts", q0, q1))
    alpha = alpha.reshape(-1, Lt * heads, L).transpose(0, 2, 1)   # (B, L, Lt*nh)
    alpha = jax.nn.softmax(2.0 * alpha, axis=1)
    q2r = q2.reshape(B, -1, heads, d)
    a = jnp.sum(
        (alpha[..., None] * q2r).reshape(B, -1, H)
        * mask.reshape(B, -1, 1).astype(jnp.float32),
        axis=1,
    )
    return a, alpha


if __name__ == "__main__":
    B, L, H, heads = 2, 8, 32, 4

    key = jax.random.PRNGKey(0)
    ks = jax.random.split(key, 8)

    ht1 = jax.random.normal(ks[0], (B, 1, H), dtype=jnp.float32)
    hidden = jax.random.normal(ks[1], (B, L, H), dtype=jnp.float32)
    lengths = jnp.array([L, 5], dtype=jnp.int32)
    mask = (jnp.arange(L)[None, :] < lengths[:, None]).astype(jnp.float32)   # (B, L)

    # Parameters (std=0.1 normal init, as in reset_parameters). linear_three/four/five
    # are unused by the forward pass and therefore omitted.
    params = {
        "w0": 0.1 * jax.random.normal(ks[2], (H, H), dtype=jnp.float32),
        "b0": 0.1 * jax.random.normal(ks[3], (H,), dtype=jnp.float32),
        "w1": 0.1 * jax.random.normal(ks[4], (H, H), dtype=jnp.float32),
        "b1": 0.1 * jax.random.normal(ks[5], (H,), dtype=jnp.float32),
        "w2": 0.1 * jax.random.normal(ks[6], (H, H), dtype=jnp.float32),
        "b2": 0.1 * jax.random.normal(ks[7], (H,), dtype=jnp.float32),
    }

    a, alpha = last_attention_forward(params, ht1, hidden, mask, heads)
    a = jax.block_until_ready(a)
    alpha = jax.block_until_ready(alpha)

    a_ref, alpha_ref = ref_forward(params, ht1, hidden, mask, heads)
    np.testing.assert_allclose(np.asarray(a), np.asarray(a_ref), rtol=1e-4, atol=1e-4)
    np.testing.assert_allclose(np.asarray(alpha), np.asarray(alpha_ref), rtol=1e-4, atol=1e-4)

    print("KERNEL_OK")
</pallas_src>

<mosaic_0001>
module attributes {stable_mosaic.version = 11 : i64} {
  func.func @_linear_kernel(%arg0: i32, %arg1: memref<2x32xf32, #tpu.memory_space<vmem>>, %arg2: memref<32x32xf32, #tpu.memory_space<vmem>>, %arg3: memref<1x32xf32, #tpu.memory_space<vmem>>, %arg4: memref<2x32xf32, #tpu.memory_space<vmem>>) attributes {dimension_semantics = [#tpu.dimension_semantics<parallel>], iteration_bounds = array<i64: 1>, scalar_prefetch = 0 : i64, scratch_operands = 0 : i64, tpu.core_type = #tpu.core_type<tc>, window_params = [{transform_indices = @transform_0, window_bounds = array<i64: 2, 32>}, {pipeline_mode = #tpu.pipeline_mode<synchronous>, transform_indices = @transform_1, window_bounds = array<i64: 32, 32>}, {pipeline_mode = #tpu.pipeline_mode<synchronous>, transform_indices = @transform_2, window_bounds = array<i64: 1, 32>}, {transform_indices = @transform_3, window_bounds = array<i64: 2, 32>}]} {
    %c0 = arith.constant 0 : index
    %c0_0 = arith.constant 0 : index
    %0 = vector.load %arg1[%c0, %c0_0] : memref<2x32xf32, #tpu.memory_space<vmem>>, vector<2x32xf32>
    %c0_1 = arith.constant 0 : index
    %c0_2 = arith.constant 0 : index
    %1 = vector.load %arg2[%c0_1, %c0_2] : memref<32x32xf32, #tpu.memory_space<vmem>>, vector<32x32xf32>
    %cst = arith.constant dense<0.000000e+00> : vector<2x32xf32>
    %2 = tpu.matmul %0, %1, %cst {dimension_numbers = #tpu.dot_dimension_numbers<[1], [0], [0], [1], [0, 0, 1, 1], [], []>} : vector<2x32xf32>, vector<32x32xf32>, vector<2x32xf32> -> vector<2x32xf32>
    %c0_3 = arith.constant 0 : index
    %c0_4 = arith.constant 0 : index
    %3 = vector.load %arg3[%c0_3, %c0_4] : memref<1x32xf32, #tpu.memory_space<vmem>>, vector<1x32xf32>
    %4 = vector.broadcast %3 : vector<1x32xf32> to vector<2x32xf32>
    %5 = arith.addf %2, %4 : vector<2x32xf32>
    %c0_5 = arith.constant 0 : index
    %c0_6 = arith.constant 0 : index
    %6 = vector.load %arg4[%c0_5, %c0_6] : memref<2x32xf32, #tpu.memory_space<vmem>>, vector<2x32xf32>
    tpu.vector_store %arg4[%c0_5, %c0_6], %5 {strides = array<i32>} : memref<2x32xf32, #tpu.memory_space<vmem>>, vector<2x32xf32>,
    return
  }
  func.func @transform_0(%arg0: i32) -> (i32, i32) {
    %c0_i32 = arith.constant 0 : i32
    %c0_i32_0 = arith.constant 0 : i32
    return %arg0, %c0_i32 : i32, i32
  }
  func.func @transform_1(%arg0: i32) -> (i32, i32) {
    %c0_i32 = arith.constant 0 : i32
    %c0_i32_0 = arith.constant 0 : i32
    %c0_i32_1 = arith.constant 0 : i32
    return %c0_i32, %c0_i32_0 : i32, i32
  }
  func.func @transform_2(%arg0: i32) -> (i32, i32) {
    %c0_i32 = arith.constant 0 : i32
    %c0_i32_0 = arith.constant 0 : i32
    %c0_i32_1 = arith.constant 0 : i32
    return %c0_i32, %c0_i32_0 : i32, i32
  }
  func.func @transform_3(%arg0: i32) -> (i32, i32) {
    %c0_i32 = arith.constant 0 : i32
    %c0_i32_0 = arith.constant 0 : i32
    return %arg0, %c0_i32 : i32, i32
  }
}

module attributes {stable_mosaic.version = 11 : i64} {
  func.func @_linear_kernel(%arg0: i32, %arg1: memref<2x32xf32, #tpu.memory_space<vmem>>, %arg2: memref<32x32xf32, #tpu.memory_space<vmem>>, %arg3: memref<1x32xf32, #tpu.memory_space<vmem>>, %arg4: memref<2x32xf32, #tpu.memory_space<vmem>>) attributes {dimension_semantics = [#tpu.dimension_semantics<parallel>], iteration_bounds = array<i64: 1>, scalar_prefetch = 0 : i64, scratch_operands = 0 : i64, tpu.core_type = #tpu.core_type<tc>, window_params = [{transform_indices = @transform_0, window_bounds = array<i64: 2, 32>}, {pipeline_mode = #tpu.pipeline_mode<synchronous>, transform_indices = @transform_1, window_bounds = array<i64: 32, 32>}, {pipeline_mode = #tpu.pipeline_mode<synchronous>, transform_indices = @transform_2, window_bounds = array<i64: 1, 32>}, {transform_indices = @transform_3, window_bounds = array<i64: 2, 32>}]} {
    %c0 = arith.constant 0 : index
    %c0_0 = arith.constant 0 : index
    %0 = vector.load %arg1[%c0, %c0_0] : memref<2x32xf32, #tpu.memory_space<vmem>>, vector<2x32xf32>
    %c0_1 = arith.constant 0 : index
    %c0_2 = arith.constant 0 : index
    %1 = vector.load %arg2[%c0_1, %c0_2] : memref<32x32xf32, #tpu.memory_space<vmem>>, vector<32x32xf32>
    %cst = arith.constant dense<0.000000e+00> : vector<2x32xf32>
    %2 = tpu.matmul %0, %1, %cst {dimension_numbers = #tpu.dot_dimension_numbers<[1], [0], [0], [1], [0, 0, 1, 1], [], []>} : vector<2x32xf32>, vector<32x32xf32>, vector<2x32xf32> -> vector<2x32xf32>
    %c0_3 = arith.constant 0 : index
    %c0_4 = arith.constant 0 : index
    %3 = vector.load %arg3[%c0_3, %c0_4] : memref<1x32xf32, #tpu.memory_space<vmem>>, vector<1x32xf32>
    %4 = vector.broadcast %3 : vector<1x32xf32> to vector<2x32xf32>
    %5 = arith.addf %2, %4 : vector<2x32xf32>
    %c0_5 = arith.constant 0 : index
    %c0_6 = arith.constant 0 : index
    %6 = vector.load %arg4[%c0_5, %c0_6] : memref<2x32xf32, #tpu.memory_space<vmem>>, vector<2x32xf32>
    tpu.vector_store %arg4[%c0_5, %c0_6], %5 {strides = array<i32>} : memref<2x32xf32, #tpu.memory_space<vmem>>, vector<2x32xf32>,
    return
  }
  func.func @transform_0(%arg0: i32) -> (i32, i32) {
    %c0_i32 = arith.constant 0 : i32
    %c0_i32_0 = arith.constant 0 : i32
    return %arg0, %c0_i32 : i32, i32
  }
  func.func @transform_1(%arg0: i32) -> (i32, i32) {
    %c0_i32 = arith.constant 0 : i32
    %c0_i32_0 = arith.constant 0 : i32
    %c0_i32_1 = arith.constant 0 : i32
    return %c0_i32, %c0_i32_0 : i32, i32
  }
  func.func @transform_2(%arg0: i32) -> (i32, i32) {
    %c0_i32 = arith.constant 0 : i32
    %c0_i32_0 = arith.constant 0 : i32
    %c0_i32_1 = arith.constant 0 : i32
    return %c0_i32, %c0_i32_0 : i32, i32
  }
  func.func @transform_3(%arg0: i32) -> (i32, i32) {
    %c0_i32 = arith.constant 0 : i32
    %c0_i32_0 = arith.constant 0 : i32
    return %arg0, %c0_i32 : i32, i32
  }
}

module attributes {stable_mosaic.version = 11 : i64} {
  func.func @_linear_kernel(%arg0: i32, %arg1: memref<2x32xf32, #tpu.memory_space<vmem>>, %arg2: memref<32x32xf32, #tpu.memory_space<vmem>>, %arg3: memref<1x32xf32, #tpu.memory_space<vmem>>, %arg4: memref<2x32xf32, #tpu.memory_space<vmem>>) attributes {dimension_semantics = [#tpu.dimension_semantics<parallel>], iteration_bounds = array<i64: 1>, scalar_prefetch = 0 : i64, scratch_operands = 0 : i64, tpu.core_type = #tpu.core_type<tc>, window_params = [{transform_indices = @transform_0, window_bounds = array<i64: 2, 32>}, {pipeline_mode = #tpu.pipeline_mode<synchronous>, transform_indices = @transform_1, window_bounds = array<i64: 32, 32>}, {pipeline_mode = #tpu.pipeline_mode<synchronous>, transform_indices = @transform_2, window_bounds = array<i64: 1, 32>}, {transform_indices = @transform_3, window_bounds = array<i64: 2, 32>}]} {
    %c0 = arith.constant 0 : index
    %c0_0 = arith.constant 0 : index
    %0 = vector.load %arg1[%c0, %c0_0] : memref<2x32xf32, #tpu.memory_space<vmem>>, vector<2x32xf32>
    %c0_1 = arith.constant 0 : index
    %c0_2 = arith.constant 0 : index
    %1 = vector.load %arg2[%c0_1, %c0_2] : memref<32x32xf32, #tpu.memory_space<vmem>>, vector<32x32xf32>
    %cst = arith.constant dense<0.000000e+00> : vector<2x32xf32>
    %2 = tpu.matmul %0, %1, %cst {dimension_numbers = #tpu.dot_dimension_numbers<[1], [0], [0], [1], [0, 0, 1, 1], [], []>} : vector<2x32xf32>, vector<32x32xf32>, vector<2x32xf32> -> vector<2x32xf32>
    %c0_3 = arith.constant 0 : index
    %c0_4 = arith.constant 0 : index
    %3 = vector.load %arg3[%c0_3, %c0_4] : memref<1x32xf32, #tpu.memory_space<vmem>>, vector<1x32xf32>
    %4 = vector.broadcast %3 : vector<1x32xf32> to vector<2x32xf32>
    %5 = arith.addf %2, %4 : vector<2x32xf32>
    %c0_5 = arith.constant 0 : index
    %c0_6 = arith.constant 0 : index
    %6 = vector.load %arg4[%c0_5, %c0_6] : memref<2x32xf32, #tpu.memory_space<vmem>>, vector<2x32xf32>
    tpu.vector_store %arg4[%c0_5, %c0_6], %5 {strides = array<i32>} : memref<2x32xf32, #tpu.memory_space<vmem>>, vector<2x32xf32>,
    return
  }
  func.func @transform_0(%arg0: i32) -> (i32, i32) {
    %c0_i32 = arith.constant 0 : i32
    %c0_i32_0 = arith.constant 0 : i32
    return %arg0, %c0_i32 : i32, i32
  }
  func.func @transform_1(%arg0: i32) -> (i32, i32) {
    %c0_i32 = arith.constant 0 : i32
    %c0_i32_0 = arith.constant 0 : i32
    %c0_i32_1 = arith.constant 0 : i32
    return %c0_i32, %c0_i32_0 : i32, i32
  }
  func.func @transform_2(%arg0: i32) -> (i32, i32) {
    %c0_i32 = arith.constant 0 : i32
    %c0_i32_0 = arith.constant 0 : i32
    %c0_i32_1 = arith.constant 0 : i32
    return %c0_i32, %c0_i32_0 : i32, i32
  }
  func.func @transform_3(%arg0: i32) -> (i32, i32) {
    %c0_i32 = arith.constant 0 : i32
    %c0_i32_0 = arith.constant 0 : i32
    return %arg0, %c0_i32 : i32, i32
  }
}

</mosaic_0001>

<llo_original>
// kernel: tpu_custom_call.1
$region0: #{tpu_custom_call.1}
  #allocation0 [shape = 'u32[]', space=smem, size = 0x4, offset = 0x4, fixed_abs, tag = 'smem constant byte address 0x4 - core index']
  #allocation1 [shape = 'u32[72,128]{1,0:T(1,128)}', space=vmem, size = 0x9000, scoped, tag = 'internal scratch']
  %s0 = inlined_call_operand.hbm [shape: f32[2,32], index: 0, kind: input, shape index: {}]
  %s1 = inlined_call_operand.hbm [shape: f32[32,32], index: 1, kind: input, shape index: {}]
  %s2 = inlined_call_operand.vmem [shape: f32[1,32], index: 2, kind: input, shape index: {}]
  %s3 = inlined_call_operand.hbm [shape: f32[2,32], index: 3, kind: output, shape index: {}]
  %s4 = sld [smem:[#allocation0]]
  $region30: #{tpu_custom_call.1} parent=0
    _
  %s6 = ssub.s32 1, %s4
  %s7 = scalar_select 0, %s6, %s4
  $region1: #{tpu_custom_call.1} parent=0
    #allocation2 [shape = 'u8[1024]{0}', space=vmem, size = 0x400, scoped, tag = 'input window, operand 0, single buffered']
    #allocation3 [shape = 's32[1]{0}', space=sflag, size = 0x4, scoped, tag = 'scoped memory for tpu_custom_call.1']
    #allocation4 [shape = 's32[1]{0}', space=sflag, size = 0x4, scoped, tag = 'scoped memory for tpu_custom_call.1']
    #allocation5 [shape = 'u8[16384]{0}', space=vmem, size = 0x4000, scoped, tag = 'input window, operand 1, single buffered']
    #allocation6 [shape = 's32[1]{0}', space=sflag, size = 0x4, scoped, tag = 'scoped memory for tpu_custom_call.1']
    #allocation7 [shape = 'u8[1024]{0}', space=vmem, size = 0x400, scoped, tag = 'output window, operand 0, single buffered']
    %8 = vsyncpa [#allocation3], 0
    %9 = vsyncpa [#allocation6], 0
    %10 = vsyncpa [#allocation4], 0
    // Predicated region
    $region2: #{tpu_custom_call.1} parent=1 // pred_check
      _
    $region3: #{tpu_custom_call.1} parent=1 // pred_check_branch
      %12 = sbr.rel (0) target = $region5
    $region4: #{tpu_custom_call.1} parent=1 // pred_region
      %14 = vsyncadd [#allocation3], 0
      %s16 = sshll.u32 %s0, 4
      %s17 = int_to_ptr.hbm [resolvable:$true] %s16
      %s18 = sshll.u32 [#allocation2], 4
      %s19 = int_to_ptr.vmem [resolvable:$true] %s18
      %21 = dma.hbm_to_vmem [thread:$0]  %s17, 32, %s19, [#allocation3]
    $region5: #{tpu_custom_call.1} parent=1 // pred_fallthru
      _
    // Predicated region
    $region6: #{tpu_custom_call.1} parent=1 // pred_check
      _
    $region7: #{tpu_custom_call.1} parent=1 // pred_check_branch
      %23 = sbr.rel (0) target = $region9
    $region8: #{tpu_custom_call.1} parent=1 // pred_region
      %25 = vsyncadd [#allocation6], 0
      %s26 = sshll.u32 %s1, 4
      %s27 = int_to_ptr.hbm [resolvable:$true] %s26
      %s28 = sshll.u32 [#allocation5], 4
      %s29 = int_to_ptr.vmem [resolvable:$true] %s28
      %34 = dma.hbm_to_vmem [thread:$0]  %s27, 512, %s29, [#allocation6], 128, 128, 8
    $region9: #{tpu_custom_call.1} parent=1 // pred_fallthru
      _
    // Predicated region
    $region10: #{tpu_custom_call.1} parent=1 // pred_check
      _
    $region11: #{tpu_custom_call.1} parent=1 // pred_check_branch
      %36 = sbr.rel (0) target = $region13
    $region12: #{tpu_custom_call.1} parent=1 // pred_region
      _
    $region13: #{tpu_custom_call.1} parent=1 // pred_fallthru
      _
    // Predicated region
    $region14: #{tpu_custom_call.1} parent=1 // pred_check
      _
    $region15: #{tpu_custom_call.1} parent=1 // pred_check_branch
      %38 = sbr.rel (0) target = $region17
    $region16: #{tpu_custom_call.1} parent=1 // pred_region
      %40 = dma.done [#allocation3], 32
    $region17: #{tpu_custom_call.1} parent=1 // pred_fallthru
      _
    // Predicated region
    $region18: #{tpu_custom_call.1} parent=1 // pred_check
      _
    $region19: #{tpu_custom_call.1} parent=1 // pred_check_branch
      %42 = sbr.rel (0) target = $region21
    $region20: #{tpu_custom_call.1} parent=1 // pred_region
      %44 = dma.done [#allocation6], 512
    $region21: #{tpu_custom_call.1} parent=1 // pred_fallthru
      _
    %v45 = vld [vmem:[#allocation2] sm:$0x3]
    %v46 = vld [vmem:[#allocation5] sm:$0xff]
    %v47 = vld [vmem:[#allocation5 + $0x8] sm:$0xff]
    %v48 = vld [vmem:[#allocation5 + $0x10] sm:$0xff]
    %v49 = vld [vmem:[#allocation5 + $0x18] sm:$0xff]
    %v50 = vld [vmem:[%s2] sm:$0x1]
    %v52 = vperm.slane %v50, 0
    %vm54 = vcmask 261120
    %v56 = vsel %vm54, %v45, 0
    %58 = vmatpush.msra.mxu0 0.0
    %59 = vmatpush.msra.mxu0 0.0
    %60 = vmatpush.msra.mxu0 0.0
    %61 = vmatpush.msra.mxu0 0.0
    %62 = vmatpush.msra.mxu0 0.0
    %63 = vmatpush.msra.mxu0 0.0
    %64 = vmatpush.msra.mxu0 0.0
    %65 = vmatpush.msra.mxu0 0.0
    %66 = vmatpush.msra.mxu0 0.0
    %67 = vmatpush.msra.mxu0 0.0
    %68 = vmatpush.msra.mxu0 0.0
    %69 = vmatpush.msra.mxu0 0.0
    %70 = vmatpush.msra.mxu0 %v49
    %71 = vmatpush.msra.mxu0 %v48
    %72 = vmatpush.msra.mxu0 %v47
    %73 = vmatpush.msra.mxu0 %v46
    %74 = vmatmul.f32.gmra.mxu0 %v56
    %v75 = vpop.f32.mrf.mxu0
    %v76 = vadd.f32 %v52, %v75
    %77 = vdwg.mxu0
    %vm78 = vcmask 254976
    %79 = vst.msk [vmem:[#allocation7] sm:$0x3] %vm78, %v76
    // Predicated region
    $region22: #{tpu_custom_call.1} parent=1 // pred_check
      _
    $region23: #{tpu_custom_call.1} parent=1 // pred_check_branch
      %81 = sbr.rel (0) target = $region25
    $region24: #{tpu_custom_call.1} parent=1 // pred_region
      %83 = vsyncadd [#allocation4], 0
      %s85 = sshll.u32 [#allocation7], 4
      %s86 = int_to_ptr.vmem [resolvable:$true] %s85
      %s87 = sshll.u32 %s3, 4
      %s88 = int_to_ptr.hbm [resolvable:$true] %s87
      %90 = dma.vmem_to_hbm [thread:$0]  %s86, 32, %s88, [#allocation4]
    $region25: #{tpu_custom_call.1} parent=1 // pred_fallthru
      _
    // Predicated region
    $region26: #{tpu_custom_call.1} parent=1 // pred_check
      _
    $region27: #{tpu_custom_call.1} parent=1 // pred_check_branch
      %92 = sbr.rel (0) target = $region29
    $region28: #{tpu_custom_call.1} parent=1 // pred_region
      %94 = dma.done [#allocation4], 32
    $region29: #{tpu_custom_call.1} parent=1 // pred_fallthru
      _
    %95 = vsyncpa [#allocation3], 1
    %96 = vsyncpa [#allocation6], 1
    %97 = vsyncpa [#allocation4], 1

// kernel: tpu_custom_call.1
$region0: #{tpu_custom_call.1}
  #allocation0 [shape = 'u32[]', space=smem, size = 0x4, offset = 0x4, fixed_abs, tag = 'smem constant byte address 0x4 - core index']
  #allocation1 [shape = 'u32[72,128]{1,0:T(1,128)}', space=vmem, size = 0x9000, scoped, tag = 'internal scratch']
  %s0 = inlined_call_operand.hbm [shape: f32[2,32], index: 0, kind: input, shape index: {}]
  %s1 = inlined_call_operand.hbm [shape: f32[32,32], index: 1, kind: input, shape index: {}]
  %s2 = inlined_call_operand.vmem [shape: f32[1,32], index: 2, kind: input, shape index: {}]
  %s3 = inlined_call_operand.hbm [shape: f32[2,32], index: 3, kind: output, shape index: {}]
  %s4 = sld [smem:[#allocation0]]
  $region30: #{tpu_custom_call.1} parent=0
    _
  %s6 = ssub.s32 1, %s4
  %s7 = scalar_select 0, %s6, %s4
  $region1: #{tpu_custom_call.1} parent=0
    #allocation2 [shape = 'u8[1024]{0}', space=vmem, size = 0x400, scoped, tag = 'input window, operand 0, single buffered']
    #allocation3 [shape = 's32[1]{0}', space=sflag, size = 0x4, scoped, tag = 'scoped memory for tpu_custom_call.1']
    #allocation4 [shape = 's32[1]{0}', space=sflag, size = 0x4, scoped, tag = 'scoped memory for tpu_custom_call.1']
    #allocation5 [shape = 'u8[16384]{0}', space=vmem, size = 0x4000, scoped, tag = 'input window, operand 1, single buffered']
    #allocation6 [shape = 's32[1]{0}', space=sflag, size = 0x4, scoped, tag = 'scoped memory for tpu_custom_call.1']
    #allocation7 [shape = 'u8[1024]{0}', space=vmem, size = 0x400, scoped, tag = 'output window, operand 0, single buffered']
    %8 = vsyncpa [#allocation3], 0
    %9 = vsyncpa [#allocation6], 0
    %10 = vsyncpa [#allocation4], 0
    // Predicated region
    $region2: #{tpu_custom_call.1} parent=1 // pred_check
      _
    $region3: #{tpu_custom_call.1} parent=1 // pred_check_branch
      %12 = sbr.rel (0) target = $region5
    $region4: #{tpu_custom_call.1} parent=1 // pred_region
      %14 = vsyncadd [#allocation3], 0
      %s16 = sshll.u32 %s0, 4
      %s17 = int_to_ptr.hbm [resolvable:$true] %s16
      %s18 = sshll.u32 [#allocation2], 4
      %s19 = int_to_ptr.vmem [resolvable:$true] %s18
      %21 = dma.hbm_to_vmem [thread:$0]  %s17, 32, %s19, [#allocation3]
    $region5: #{tpu_custom_call.1} parent=1 // pred_fallthru
      _
    // Predicated region
    $region6: #{tpu_custom_call.1} parent=1 // pred_check
      _
    $region7: #{tpu_custom_call.1} parent=1 // pred_check_branch
      %23 = sbr.rel (0) target = $region9
    $region8: #{tpu_custom_call.1} parent=1 // pred_region
      %25 = vsyncadd [#allocation6], 0
      %s26 = sshll.u32 %s1, 4
      %s27 = int_to_ptr.hbm [resolvable:$true] %s26
      %s28 = sshll.u32 [#allocation5], 4
      %s29 = int_to_ptr.vmem [resolvable:$true] %s28
      %34 = dma.hbm_to_vmem [thread:$0]  %s27, 512, %s29, [#allocation6], 128, 128, 8
    $region9: #{tpu_custom_call.1} parent=1 // pred_fallthru
      _
    // Predicated region
    $region10: #{tpu_custom_call.1} parent=1 // pred_check
      _
    $region11: #{tpu_custom_call.1} parent=1 // pred_check_branch
      %36 = sbr.rel (0) target = $region13
    $region12: #{tpu_custom_call.1} parent=1 // pred_region
      _
    $region13: #{tpu_custom_call.1} parent=1 // pred_fallthru
      _
    // Predicated region
    $region14: #{tpu_custom_call.1} parent=1 // pred_check
      _
    $region15: #{tpu_custom_call.1} parent=1 // pred_check_branch
      %38 = sbr.rel (0) target = $region17
    $region16: #{tpu_custom_call.1} parent=1 // pred_region
      %40 = dma.done [#allocation3], 32
    $region17: #{tpu_custom_call.1} parent=1 // pred_fallthru
      _
    // Predicated region
    $region18: #{tpu_custom_call.1} parent=1 // pred_check
      _
    $region19: #{tpu_custom_call.1} parent=1 // pred_check_branch
      %42 = sbr.rel (0) target = $region21
    $region20: #{tpu_custom_call.1} parent=1 // pred_region
      %44 = dma.done [#allocation6], 512
    $region21: #{tpu_custom_call.1} parent=1 // pred_fallthru
      _
    %v45 = vld [vmem:[#allocation2] sm:$0x3]
    %v46 = vld [vmem:[#allocation5] sm:$0xff]
    %v47 = vld [vmem:[#allocation5 + $0x8] sm:$0xff]
    %v48 = vld [vmem:[#allocation5 + $0x10] sm:$0xff]
    %v49 = vld [vmem:[#allocation5 + $0x18] sm:$0xff]
    %v50 = vld [vmem:[%s2] sm:$0x1]
    %v52 = vperm.slane %v50, 0
    %vm54 = vcmask 261120
    %v56 = vsel %vm54, %v45, 0
    %58 = vmatpush.msra.mxu0 0.0
    %59 = vmatpush.msra.mxu0 0.0
    %60 = vmatpush.msra.mxu0 0.0
    %61 = vmatpush.msra.mxu0 0.0
    %62 = vmatpush.msra.mxu0 0.0
    %63 = vmatpush.msra.mxu0 0.0
    %64 = vmatpush.msra.mxu0 0.0
    %65 = vmatpush.msra.mxu0 0.0
    %66 = vmatpush.msra.mxu0 0.0
    %67 = vmatpush.msra.mxu0 0.0
    %68 = vmatpush.msra.mxu0 0.0
    %69 = vmatpush.msra.mxu0 0.0
    %70 = vmatpush.msra.mxu0 %v49
    %71 = vmatpush.msra.mxu0 %v48
    %72 = vmatpush.msra.mxu0 %v47
    %73 = vmatpush.msra.mxu0 %v46
    %74 = vmatmul.f32.gmra.mxu0 %v56
    %v75 = vpop.f32.mrf.mxu0
    %v76 = vadd.f32 %v52, %v75
    %77 = vdwg.mxu0
    %vm78 = vcmask 254976
    %79 = vst.msk [vmem:[#allocation7] sm:$0x3] %vm78, %v76
    // Predicated region
    $region22: #{tpu_custom_call.1} parent=1 // pred_check
      _
    $region23: #{tpu_custom_call.1} parent=1 // pred_check_branch
      %81 = sbr.rel (0) target = $region25
    $region24: #{tpu_custom_call.1} parent=1 // pred_region
      %83 = vsyncadd [#allocation4], 0
      %s85 = sshll.u32 [#allocation7], 4
      %s86 = int_to_ptr.vmem [resolvable:$true] %s85
      %s87 = sshll.u32 %s3, 4
      %s88 = int_to_ptr.hbm [resolvable:$true] %s87
      %90 = dma.vmem_to_hbm [thread:$0]  %s86, 32, %s88, [#allocation4]
    $region25: #{tpu_custom_call.1} parent=1 // pred_fallthru
      _
    // Predicated region
    $region26: #{tpu_custom_call.1} parent=1 // pred_check
      _
    $region27: #{tpu_custom_call.1} parent=1 // pred_check_branch
      %92 = sbr.rel (0) target = $region29
    $region28: #{tpu_custom_call.1} parent=1 // pred_region
      %94 = dma.done [#allocation4], 32
    $region29: #{tpu_custom_call.1} parent=1 // pred_fallthru
      _
    %95 = vsyncpa [#allocation3], 1
    %96 = vsyncpa [#allocation6], 1
    %97 = vsyncpa [#allocation4], 1

// kernel: tpu_custom_call.1
$region0: #{tpu_custom_call.1}
  #allocation0 [shape = 'u32[]', space=smem, size = 0x4, offset = 0x4, fixed_abs, tag = 'smem constant byte address 0x4 - core index']
  #allocation1 [shape = 'u32[72,128]{1,0:T(1,128)}', space=vmem, size = 0x9000, scoped, tag = 'internal scratch']
  %s0 = inlined_call_operand.hbm [shape: f32[2,32], index: 0, kind: input, shape index: {}]
  %s1 = inlined_call_operand.hbm [shape: f32[32,32], index: 1, kind: input, shape index: {}]
  %s2 = inlined_call_operand.vmem [shape: f32[1,32], index: 2, kind: input, shape index: {}]
  %s3 = inlined_call_operand.hbm [shape: f32[2,32], index: 3, kind: output, shape index: {}]
  %s4 = sld [smem:[#allocation0]]
  $region30: #{tpu_custom_call.1} parent=0
    _
  %s6 = ssub.s32 1, %s4
  %s7 = scalar_select 0, %s6, %s4
  $region1: #{tpu_custom_call.1} parent=0
    #allocation2 [shape = 'u8[1024]{0}', space=vmem, size = 0x400, scoped, tag = 'input window, operand 0, single buffered']
    #allocation3 [shape = 's32[1]{0}', space=sflag, size = 0x4, scoped, tag = 'scoped memory for tpu_custom_call.1']
    #allocation4 [shape = 's32[1]{0}', space=sflag, size = 0x4, scoped, tag = 'scoped memory for tpu_custom_call.1']
    #allocation5 [shape = 'u8[16384]{0}', space=vmem, size = 0x4000, scoped, tag = 'input window, operand 1, single buffered']
    #allocation6 [shape = 's32[1]{0}', space=sflag, size = 0x4, scoped, tag = 'scoped memory for tpu_custom_call.1']
    #allocation7 [shape = 'u8[1024]{0}', space=vmem, size = 0x400, scoped, tag = 'output window, operand 0, single buffered']
    %8 = vsyncpa [#allocation3], 0
    %9 = vsyncpa [#allocation6], 0
    %10 = vsyncpa [#allocation4], 0
    // Predicated region
    $region2: #{tpu_custom_call.1} parent=1 // pred_check
      _
    $region3: #{tpu_custom_call.1} parent=1 // pred_check_branch
      %12 = sbr.rel (0) target = $region5
    $region4: #{tpu_custom_call.1} parent=1 // pred_region
      %14 = vsyncadd [#allocation3], 0
      %s16 = sshll.u32 %s0, 4
      %s17 = int_to_ptr.hbm [resolvable:$true] %s16
      %s18 = sshll.u32 [#allocation2], 4
      %s19 = int_to_ptr.vmem [resolvable:$true] %s18
      %21 = dma.hbm_to_vmem [thread:$0]  %s17, 32, %s19, [#allocation3]
    $region5: #{tpu_custom_call.1} parent=1 // pred_fallthru
      _
    // Predicated region
    $region6: #{tpu_custom_call.1} parent=1 // pred_check
      _
    $region7: #{tpu_custom_call.1} parent=1 // pred_check_branch
      %23 = sbr.rel (0) target = $region9
    $region8: #{tpu_custom_call.1} parent=1 // pred_region
      %25 = vsyncadd [#allocation6], 0
      %s26 = sshll.u32 %s1, 4
      %s27 = int_to_ptr.hbm [resolvable:$true] %s26
      %s28 = sshll.u32 [#allocation5], 4
      %s29 = int_to_ptr.vmem [resolvable:$true] %s28
      %34 = dma.hbm_to_vmem [thread:$0]  %s27, 512, %s29, [#allocation6], 128, 128, 8
    $region9: #{tpu_custom_call.1} parent=1 // pred_fallthru
      _
    // Predicated region
    $region10: #{tpu_custom_call.1} parent=1 // pred_check
      _
    $region11: #{tpu_custom_call.1} parent=1 // pred_check_branch
      %36 = sbr.rel (0) target = $region13
    $region12: #{tpu_custom_call.1} parent=1 // pred_region
      _
    $region13: #{tpu_custom_call.1} parent=1 // pred_fallthru
      _
    // Predicated region
    $region14: #{tpu_custom_call.1} parent=1 // pred_check
      _
    $region15: #{tpu_custom_call.1} parent=1 // pred_check_branch
      %38 = sbr.rel (0) target = $region17
    $region16: #{tpu_custom_call.1} parent=1 // pred_region
      %40 = dma.done [#allocation3], 32
    $region17: #{tpu_custom_call.1} parent=1 // pred_fallthru
      _
    // Predicated region
    $region18: #{tpu_custom_call.1} parent=1 // pred_check
      _
    $region19: #{tpu_custom_call.1} parent=1 // pred_check_branch
      %42 = sbr.rel (0) target = $region21
    $region20: #{tpu_custom_call.1} parent=1 // pred_region
      %44 = dma.done [#allocation6], 512
    $region21: #{tpu_custom_call.1} parent=1 // pred_fallthru
      _
    %v45 = vld [vmem:[#allocation2] sm:$0x3]
    %v46 = vld [vmem:[#allocation5] sm:$0xff]
    %v47 = vld [vmem:[#allocation5 + $0x8] sm:$0xff]
    %v48 = vld [vmem:[#allocation5 + $0x10] sm:$0xff]
    %v49 = vld [vmem:[#allocation5 + $0x18] sm:$0xff]
    %v50 = vld [vmem:[%s2] sm:$0x1]
    %v52 = vperm.slane %v50, 0
    %vm54 = vcmask 261120
    %v56 = vsel %vm54, %v45, 0
    %58 = vmatpush.msra.mxu0 0.0
    %59 = vmatpush.msra.mxu0 0.0
    %60 = vmatpush.msra.mxu0 0.0
    %61 = vmatpush.msra.mxu0 0.0
    %62 = vmatpush.msra.mxu0 0.0
    %63 = vmatpush.msra.mxu0 0.0
    %64 = vmatpush.msra.mxu0 0.0
    %65 = vmatpush.msra.mxu0 0.0
    %66 = vmatpush.msra.mxu0 0.0
    %67 = vmatpush.msra.mxu0 0.0
    %68 = vmatpush.msra.mxu0 0.0
    %69 = vmatpush.msra.mxu0 0.0
    %70 = vmatpush.msra.mxu0 %v49
    %71 = vmatpush.msra.mxu0 %v48
    %72 = vmatpush.msra.mxu0 %v47
    %73 = vmatpush.msra.mxu0 %v46
    %74 = vmatmul.f32.gmra.mxu0 %v56
    %v75 = vpop.f32.mrf.mxu0
    %v76 = vadd.f32 %v52, %v75
    %77 = vdwg.mxu0
    %vm78 = vcmask 254976
    %79 = vst.msk [vmem:[#allocation7] sm:$0x3] %vm78, %v76
    // Predicated region
    $region22: #{tpu_custom_call.1} parent=1 // pred_check
      _
    $region23: #{tpu_custom_call.1} parent=1 // pred_check_branch
      %81 = sbr.rel (0) target = $region25
    $region24: #{tpu_custom_call.1} parent=1 // pred_region
      %83 = vsyncadd [#allocation4], 0
      %s85 = sshll.u32 [#allocation7], 4
      %s86 = int_to_ptr.vmem [resolvable:$true] %s85
      %s87 = sshll.u32 %s3, 4
      %s88 = int_to_ptr.hbm [resolvable:$true] %s87
      %90 = dma.vmem_to_hbm [thread:$0]  %s86, 32, %s88, [#allocation4]
    $region25: #{tpu_custom_call.1} parent=1 // pred_fallthru
      _
    // Predicated region
    $region26: #{tpu_custom_call.1} parent=1 // pred_check
      _
    $region27: #{tpu_custom_call.1} parent=1 // pred_check_branch
      %92 = sbr.rel (0) target = $region29
    $region28: #{tpu_custom_call.1} parent=1 // pred_region
      %94 = dma.done [#allocation4], 32
    $region29: #{tpu_custom_call.1} parent=1 // pred_fallthru
      _
    %95 = vsyncpa [#allocation3], 1
    %96 = vsyncpa [#allocation6], 1
    %97 = vsyncpa [#allocation4], 1

</llo_original>
